<compile_context>
chip_gen: v7x
topology: tpu7x:2x2x1
jax: 0.10.0
libtpu: 0.0.40
codegen_flags: <defaults>
</compile_context>

<pallas_src>
import functools

import jax
import jax.numpy as jnp
from jax.experimental import pallas as pl
from jax.experimental.pallas import tpu as pltpu

EPS = 1e-3
MOMENTUM = 0.01
RMAX = 3.0
DMAX = 5.0
WARMUP_STEPS = 100000


def _round_up(v, m):
    return (v + m - 1) // m * m


# ---------------------------------------------------------------------------
# Kernels
# ---------------------------------------------------------------------------
def _train_kernel(flag_ref, x_ref, ra_mean_ref, ra_var_ref, scale_ref, bias_ref,
                  y_ref, new_mean_ref, new_var_ref):
    """Training-mode BatchRenorm on one (N, Ct) feature tile.

    flag_ref: SMEM int32[1] = [steps > warmup_steps].
    """
    use_running = flag_ref[0] > 0

    x = x_ref[...]                               # (N, Ct) f32
    n = x.shape[0]
    ra_mean = ra_mean_ref[...]                   # (1, Ct)
    ra_var = ra_var_ref[...]                     # (1, Ct)

    # --- batch statistics (dim 0), unbiased variance; two-pass for stability
    batch_mean = jnp.mean(x, axis=0, keepdims=True)                    # (1, Ct)
    diff = x - batch_mean
    batch_var = jnp.sum(diff * diff, axis=0, keepdims=True) / (n - 1)  # (1, Ct)

    # --- batch-renorm correction (all per-feature, i.e. (1, Ct) work only) ---
    batch_std = jnp.sqrt(batch_var + EPS)
    running_std = jnp.sqrt(ra_var + EPS)
    r = jnp.clip(batch_std / running_std, 1.0 / RMAX, RMAX)
    d = jnp.clip((batch_mean - ra_mean) / running_std, -DMAX, DMAX)
    # NOTE: sqrt(batch_var) without EPS here is intentional (matches sb3 code).
    corr_mean = batch_mean - d * jnp.sqrt(batch_var) / r
    corr_var = batch_var / (r * r)

    custom_mean = jnp.where(use_running, corr_mean, batch_mean)
    custom_var = jnp.where(use_running, corr_var, batch_var)

    # --- fold normalize + affine into per-feature y = x * a + b --------------
    inv_std = jax.lax.rsqrt(custom_var + EPS)    # EUP, (1, Ct) only
    a = scale_ref[...] * inv_std
    b = bias_ref[...] - custom_mean * a
    y_ref[...] = x * a + b                       # single mul+add per element

    # --- running statistics EMA update (aliased in place) --------------------
    new_mean_ref[...] = ra_mean + MOMENTUM * (batch_mean - ra_mean)
    new_var_ref[...] = ra_var + MOMENTUM * (batch_var - ra_var)


def _eval_kernel(x_ref, ra_mean_ref, ra_var_ref, scale_ref, bias_ref, y_ref):
    """Eval-mode BatchRenorm: pure per-feature affine with running stats."""
    inv_std = jax.lax.rsqrt(ra_var_ref[...] + EPS)
    a = scale_ref[...] * inv_std
    b = bias_ref[...] - ra_mean_ref[...] * a
    y_ref[...] = x_ref[...] * a + b


# ---------------------------------------------------------------------------
# Wrapper
# ---------------------------------------------------------------------------
@functools.partial(jax.jit, static_argnames=("training",))
def batch_renorm_forward(x, ra_mean, ra_var, steps, scale, bias, *, training=True):
    """Functional BatchRenorm forward.

    x: (N, C) f32.  ra_mean/ra_var/scale/bias: (C,) f32.  steps: int32 scalar.
    Returns (y, new_ra_mean, new_ra_var, new_steps).
    """
    n, c = x.shape

    # Lane-density fix: pad features up to the tile width (multiple of 128).
    ct = min(512, _round_up(c, 128))      # feature tile width (lane-dense)
    cp = _round_up(c, ct)                 # padded feature count
    pad = cp - c

    def pad_feat(v, fill):
        v2 = v.reshape(1, c).astype(jnp.float32)
        if pad:
            v2 = jnp.pad(v2, ((0, 0), (0, pad)), constant_values=fill)
        return v2

    xp = jnp.pad(x, ((0, 0), (0, pad))) if pad else x
    ra_mean2 = pad_feat(ra_mean, 0.0)
    ra_var2 = pad_feat(ra_var, 1.0)       # pad var with 1 -> no degenerate rsqrt
    scale2 = pad_feat(scale, 1.0)
    bias2 = pad_feat(bias, 0.0)

    grid = (cp // ct,)
    # index_maps receive (grid_idx, *scalar_prefetch_refs); *_ absorbs the latter.
    x_spec = pl.BlockSpec((n, ct), lambda j, *_: (0, j))
    vec_spec = pl.BlockSpec((1, ct), lambda j, *_: (0, j))
    cparams = pltpu.CompilerParams(dimension_semantics=("parallel",))

    if training:
        flag = jnp.reshape(
            (jnp.asarray(steps) > WARMUP_STEPS).astype(jnp.int32), (1,))
        y, new_mean, new_var = pl.pallas_call(
            _train_kernel,
            out_shape=(
                jax.ShapeDtypeStruct((n, cp), jnp.float32),
                jax.ShapeDtypeStruct((1, cp), jnp.float32),
                jax.ShapeDtypeStruct((1, cp), jnp.float32),
            ),
            grid_spec=pltpu.PrefetchScalarGridSpec(
                num_scalar_prefetch=1,
                grid=grid,
                in_specs=[x_spec, vec_spec, vec_spec, vec_spec, vec_spec],
                out_specs=(x_spec, vec_spec, vec_spec),
            ),
            # ra_mean / ra_var buffers updated in place (inputs 2,3 -> outputs 1,2).
            input_output_aliases={2: 1, 3: 2},
            compiler_params=cparams,
        )(flag, xp, ra_mean2, ra_var2, scale2, bias2)
        new_steps = steps + jnp.int32(1)
    else:
        y = pl.pallas_call(
            _eval_kernel,
            out_shape=jax.ShapeDtypeStruct((n, cp), jnp.float32),
            grid_spec=pltpu.PrefetchScalarGridSpec(
                num_scalar_prefetch=0,
                grid=grid,
                in_specs=[x_spec, vec_spec, vec_spec, vec_spec, vec_spec],
                out_specs=x_spec,
            ),
            compiler_params=cparams,
        )(xp, ra_mean2, ra_var2, scale2, bias2)
        new_mean, new_var = ra_mean2, ra_var2
        new_steps = steps

    return y[:, :c], new_mean[0, :c], new_var[0, :c], new_steps


# ---------------------------------------------------------------------------
# Pure-JAX reference (mirrors the PyTorch module)
# ---------------------------------------------------------------------------
def _reference_forward(x, ra_mean, ra_var, steps, scale, bias, training=True):
    if training:
        batch_mean = x.mean(axis=0)
        batch_var = x.var(axis=0, ddof=1)
        batch_std = jnp.sqrt(batch_var + EPS)
        if steps > WARMUP_STEPS:
            running_std = jnp.sqrt(ra_var + EPS)
            r = jnp.clip(batch_std / running_std, 1.0 / RMAX, RMAX)
            d = jnp.clip((batch_mean - ra_mean) / running_std, -DMAX, DMAX)
            custom_mean = batch_mean - d * jnp.sqrt(batch_var) / r
            custom_var = batch_var / r**2
        else:
            custom_mean, custom_var = batch_mean, batch_var
        new_mean = ra_mean + MOMENTUM * (batch_mean - ra_mean)
        new_var = ra_var + MOMENTUM * (batch_var - ra_var)
    else:
        custom_mean, custom_var = ra_mean, ra_var
        new_mean, new_var = ra_mean, ra_var
    y = (x - custom_mean[None]) / jnp.sqrt(custom_var[None] + EPS)
    y = scale * y + bias
    return y, new_mean, new_var


if __name__ == "__main__":
    key = jax.random.PRNGKey(0)
    N, C = 8, 32  # batch=8, num_features=32 (typical small RL MLP width)

    k1, _ = jax.random.split(key)
    x = jax.random.normal(k1, (N, C), dtype=jnp.float32) * 2.0 + 0.5

    # Deterministic parameters / buffers (module init, perturbed so both
    # code paths are non-trivial).
    ra_mean = jnp.zeros((C,), jnp.float32) + 0.1
    ra_var = jnp.ones((C,), jnp.float32) * 1.5
    scale = jnp.ones((C,), jnp.float32) * 1.2
    bias = jnp.zeros((C,), jnp.float32) - 0.3

    ok = True
    # (warmup training, post-warmup training, eval)
    for steps, training in [(10, True), (WARMUP_STEPS + 5, True), (50, False)]:
        y, nm, nv, ns = batch_renorm_forward(
            x, ra_mean, ra_var, jnp.int32(steps), scale, bias, training=training
        )
        jax.block_until_ready(y)
        y_ref, nm_ref, nv_ref = _reference_forward(
            x, ra_mean, ra_var, steps, scale, bias, training=training
        )
        ok &= bool(jnp.allclose(y, y_ref, atol=3e-5, rtol=1e-5))
        ok &= bool(jnp.allclose(nm, nm_ref, atol=1e-6, rtol=1e-6))
        ok &= bool(jnp.allclose(nv, nv_ref, atol=1e-6, rtol=1e-6))

    if ok:
        print("KERNEL_OK")
    else:
        print("MISMATCH")
</pallas_src>

<mosaic_0001>
module attributes {stable_mosaic.version = 11 : i64} {
  func.func @_train_kernel(%arg0: i32, %arg1: memref<1xi32, #tpu.memory_space<smem>>, %arg2: memref<8x128xf32, #tpu.memory_space<vmem>>, %arg3: memref<1x128xf32, #tpu.memory_space<vmem>>, %arg4: memref<1x128xf32, #tpu.memory_space<vmem>>, %arg5: memref<1x128xf32, #tpu.memory_space<vmem>>, %arg6: memref<1x128xf32, #tpu.memory_space<vmem>>, %arg7: memref<8x128xf32, #tpu.memory_space<vmem>>, %arg8: memref<1x128xf32, #tpu.memory_space<vmem>>, %arg9: memref<1x128xf32, #tpu.memory_space<vmem>>) attributes {dimension_semantics = [#tpu.dimension_semantics<parallel>], iteration_bounds = array<i64: 1>, scalar_prefetch = 1 : i64, scratch_operands = 0 : i64, tpu.core_type = #tpu.core_type<tc>, window_params = [{transform_indices = @transform_0, window_bounds = array<i64: 8, 128>}, {transform_indices = @transform_1, window_bounds = array<i64: 1, 128>}, {transform_indices = @transform_2, window_bounds = array<i64: 1, 128>}, {transform_indices = @transform_3, window_bounds = array<i64: 1, 128>}, {transform_indices = @transform_4, window_bounds = array<i64: 1, 128>}, {transform_indices = @transform_5, window_bounds = array<i64: 8, 128>}, {transform_indices = @transform_6, window_bounds = array<i64: 1, 128>}, {transform_indices = @transform_7, window_bounds = array<i64: 1, 128>}]} {
    %c0 = arith.constant 0 : index
    %0 = memref.load %arg1[%c0] : memref<1xi32, #tpu.memory_space<smem>>
    %c0_i32 = arith.constant 0 : i32
    %1 = arith.cmpi sgt, %0, %c0_i32 : i32
    %c0_0 = arith.constant 0 : index
    %c0_1 = arith.constant 0 : index
    %2 = vector.load %arg2[%c0_0, %c0_1] : memref<8x128xf32, #tpu.memory_space<vmem>>, vector<8x128xf32>
    %c0_2 = arith.constant 0 : index
    %c0_3 = arith.constant 0 : index
    %3 = vector.load %arg3[%c0_2, %c0_3] : memref<1x128xf32, #tpu.memory_space<vmem>>, vector<1x128xf32>
    %c0_4 = arith.constant 0 : index
    %c0_5 = arith.constant 0 : index
    %4 = vector.load %arg4[%c0_4, %c0_5] : memref<1x128xf32, #tpu.memory_space<vmem>>, vector<1x128xf32>
    %cst = arith.constant dense<0.000000e+00> : vector<128xf32>
    %5 = vector.multi_reduction <add>, %2, %cst [0] : vector<8x128xf32> to vector<128xf32>
    %6 = vector.shape_cast %5 : vector<128xf32> to vector<1x128xf32>
    %cst_6 = arith.constant 8.000000e+00 : f32
    %7 = vector.broadcast %cst_6 : f32 to vector<1x128xf32>
    %8 = arith.divf %6, %7 : vector<1x128xf32>
    %9 = vector.broadcast %8 : vector<1x128xf32> to vector<8x128xf32>
    %10 = arith.subf %2, %9 : vector<8x128xf32>
    %11 = arith.mulf %10, %10 : vector<8x128xf32>
    %cst_7 = arith.constant dense<0.000000e+00> : vector<128xf32>
    %12 = vector.multi_reduction <add>, %11, %cst_7 [0] : vector<8x128xf32> to vector<128xf32>
    %13 = vector.shape_cast %12 : vector<128xf32> to vector<1x128xf32>
    %cst_8 = arith.constant 7.000000e+00 : f32
    %14 = vector.broadcast %cst_8 : f32 to vector<1x128xf32>
    %15 = arith.divf %13, %14 : vector<1x128xf32>
    %cst_9 = arith.constant 1.000000e-03 : f32
    %16 = vector.broadcast %cst_9 : f32 to vector<1x128xf32>
    %17 = arith.addf %15, %16 : vector<1x128xf32>
    %18 = math.sqrt %17 : vector<1x128xf32>
    %cst_10 = arith.constant 1.000000e-03 : f32
    %19 = vector.broadcast %cst_10 : f32 to vector<1x128xf32>
    %20 = arith.addf %4, %19 : vector<1x128xf32>
    %21 = math.sqrt %20 : vector<1x128xf32>
    %22 = arith.divf %18, %21 : vector<1x128xf32>
    %cst_11 = arith.constant 0.333333343 : f32
    %cst_12 = arith.constant 3.000000e+00 : f32
    %23 = vector.broadcast %cst_11 : f32 to vector<1x128xf32>
    %24 = arith.maximumf %23, %22 : vector<1x128xf32>
    %25 = vector.broadcast %cst_12 : f32 to vector<1x128xf32>
    %26 = arith.minimumf %25, %24 : vector<1x128xf32>
    %27 = arith.subf %8, %3 : vector<1x128xf32>
    %28 = arith.divf %27, %21 : vector<1x128xf32>
    %cst_13 = arith.constant -5.000000e+00 : f32
    %cst_14 = arith.constant 5.000000e+00 : f32
    %29 = vector.broadcast %cst_13 : f32 to vector<1x128xf32>
    %30 = arith.maximumf %29, %28 : vector<1x128xf32>
    %31 = vector.broadcast %cst_14 : f32 to vector<1x128xf32>
    %32 = arith.minimumf %31, %30 : vector<1x128xf32>
    %33 = math.sqrt %15 : vector<1x128xf32>
    %34 = arith.mulf %32, %33 : vector<1x128xf32>
    %35 = arith.divf %34, %26 : vector<1x128xf32>
    %36 = arith.subf %8, %35 : vector<1x128xf32>
    %37 = arith.mulf %26, %26 : vector<1x128xf32>
    %38 = arith.divf %15, %37 : vector<1x128xf32>
    %39 = arith.select %1, %36, %8 : vector<1x128xf32>
    %40 = arith.select %1, %38, %15 : vector<1x128xf32>
    %cst_15 = arith.constant 1.000000e-03 : f32
    %41 = vector.broadcast %cst_15 : f32 to vector<1x128xf32>
    %42 = arith.addf %40, %41 : vector<1x128xf32>
    %43 = math.rsqrt %42 : vector<1x128xf32>
    %c0_16 = arith.constant 0 : index
    %c0_17 = arith.constant 0 : index
    %44 = vector.load %arg5[%c0_16, %c0_17] : memref<1x128xf32, #tpu.memory_space<vmem>>, vector<1x128xf32>
    %45 = arith.mulf %44, %43 : vector<1x128xf32>
    %c0_18 = arith.constant 0 : index
    %c0_19 = arith.constant 0 : index
    %46 = vector.load %arg6[%c0_18, %c0_19] : memref<1x128xf32, #tpu.memory_space<vmem>>, vector<1x128xf32>
    %47 = arith.mulf %39, %45 : vector<1x128xf32>
    %48 = arith.subf %46, %47 : vector<1x128xf32>
    %49 = vector.broadcast %45 : vector<1x128xf32> to vector<8x128xf32>
    %50 = arith.mulf %2, %49 : vector<8x128xf32>
    %51 = vector.broadcast %48 : vector<1x128xf32> to vector<8x128xf32>
    %52 = arith.addf %50, %51 : vector<8x128xf32>
    %c0_20 = arith.constant 0 : index
    %c0_21 = arith.constant 0 : index
    %53 = vector.load %arg7[%c0_20, %c0_21] : memref<8x128xf32, #tpu.memory_space<vmem>>, vector<8x128xf32>
    tpu.vector_store %arg7[%c0_20, %c0_21], %52 {strides = array<i32>} : memref<8x128xf32, #tpu.memory_space<vmem>>, vector<8x128xf32>,
    %54 = arith.subf %8, %3 : vector<1x128xf32>
    %cst_22 = arith.constant 0.00999999977 : f32
    %55 = vector.broadcast %cst_22 : f32 to vector<1x128xf32>
    %56 = arith.mulf %55, %54 : vector<1x128xf32>
    %57 = arith.addf %3, %56 : vector<1x128xf32>
    %c0_23 = arith.constant 0 : index
    %c0_24 = arith.constant 0 : index
    %58 = vector.load %arg8[%c0_23, %c0_24] : memref<1x128xf32, #tpu.memory_space<vmem>>, vector<1x128xf32>
    tpu.vector_store %arg8[%c0_23, %c0_24], %57 {strides = array<i32>} : memref<1x128xf32, #tpu.memory_space<vmem>>, vector<1x128xf32>,
    %59 = arith.subf %15, %4 : vector<1x128xf32>
    %cst_25 = arith.constant 0.00999999977 : f32
    %60 = vector.broadcast %cst_25 : f32 to vector<1x128xf32>
    %61 = arith.mulf %60, %59 : vector<1x128xf32>
    %62 = arith.addf %4, %61 : vector<1x128xf32>
    %c0_26 = arith.constant 0 : index
    %c0_27 = arith.constant 0 : index
    %63 = vector.load %arg9[%c0_26, %c0_27] : memref<1x128xf32, #tpu.memory_space<vmem>>, vector<1x128xf32>
    tpu.vector_store %arg9[%c0_26, %c0_27], %62 {strides = array<i32>} : memref<1x128xf32, #tpu.memory_space<vmem>>, vector<1x128xf32>,
    return
  }
  func.func @transform_0(%arg0: i32, %arg1: memref<1xi32, #tpu.memory_space<smem>>) -> (i32, i32) {
    %c0_i32 = arith.constant 0 : i32
    %c0_i32_0 = arith.constant 0 : i32
    return %c0_i32, %arg0 : i32, i32
  }
  func.func @transform_1(%arg0: i32, %arg1: memref<1xi32, #tpu.memory_space<smem>>) -> (i32, i32) {
    %c0_i32 = arith.constant 0 : i32
    %c0_i32_0 = arith.constant 0 : i32
    return %c0_i32, %arg0 : i32, i32
  }
  func.func @transform_2(%arg0: i32, %arg1: memref<1xi32, #tpu.memory_space<smem>>) -> (i32, i32) {
    %c0_i32 = arith.constant 0 : i32
    %c0_i32_0 = arith.constant 0 : i32
    return %c0_i32, %arg0 : i32, i32
  }
  func.func @transform_3(%arg0: i32, %arg1: memref<1xi32, #tpu.memory_space<smem>>) -> (i32, i32) {
    %c0_i32 = arith.constant 0 : i32
    %c0_i32_0 = arith.constant 0 : i32
    return %c0_i32, %arg0 : i32, i32
  }
  func.func @transform_4(%arg0: i32, %arg1: memref<1xi32, #tpu.memory_space<smem>>) -> (i32, i32) {
    %c0_i32 = arith.constant 0 : i32
    %c0_i32_0 = arith.constant 0 : i32
    return %c0_i32, %arg0 : i32, i32
  }
  func.func @transform_5(%arg0: i32, %arg1: memref<1xi32, #tpu.memory_space<smem>>) -> (i32, i32) {
    %c0_i32 = arith.constant 0 : i32
    %c0_i32_0 = arith.constant 0 : i32
    return %c0_i32, %arg0 : i32, i32
  }
  func.func @transform_6(%arg0: i32, %arg1: memref<1xi32, #tpu.memory_space<smem>>) -> (i32, i32) {
    %c0_i32 = arith.constant 0 : i32
    %c0_i32_0 = arith.constant 0 : i32
    return %c0_i32, %arg0 : i32, i32
  }
  func.func @transform_7(%arg0: i32, %arg1: memref<1xi32, #tpu.memory_space<smem>>) -> (i32, i32) {
    %c0_i32 = arith.constant 0 : i32
    %c0_i32_0 = arith.constant 0 : i32
    return %c0_i32, %arg0 : i32, i32
  }
}

</mosaic_0001>

<llo_original>
// kernel: batch_renorm_forward.1
$region0: #{batch_renorm_forward.1}
  #allocation0 [shape = 'u32[]', space=smem, size = 0x4, offset = 0x4, fixed_abs, tag = 'smem constant byte address 0x4 - core index']
  #allocation1 [shape = 'u32[144,128]{1,0:T(1,128)}', space=vmem, size = 0x12000, scoped, tag = 'internal scratch']
  #allocation2 [shape = 's32[1]{0}', space=sflag, size = 0x4, scoped, tag = 'scoped memory for batch_renorm_forward.1']
  #allocation3 [shape = 's32[1]{0:T(128)S(6)}', space=smem, size = 0x200, scoped, tag = 'prefetched SMEM operand 0']
  %s0 = inlined_call_operand.<no memory space> [shape: s32[1], index: 0, kind: input, shape index: {}]
  %s1 = inlined_call_operand.vmem [shape: f32[8,128], index: 1, kind: input, shape index: {}]
  %s2 = inlined_call_operand.vmem [shape: f32[1,128], index: 2, kind: input, shape index: {}, may-alias: {2,7}]
  %s3 = inlined_call_operand.vmem [shape: f32[1,128], index: 3, kind: input, shape index: {}, may-alias: {3,8}]
  %s4 = inlined_call_operand.vmem [shape: f32[1,128], index: 4, kind: input, shape index: {}]
  %s5 = inlined_call_operand.vmem [shape: f32[1,128], index: 5, kind: input, shape index: {}]
  %s6 = inlined_call_operand.hbm [shape: f32[8,128], index: 6, kind: output, shape index: {0}]
  %s7 = inlined_call_operand.vmem [shape: f32[1,128], index: 7, kind: output, shape index: {1}, may-alias: {2,7}]
  %s8 = inlined_call_operand.vmem [shape: f32[1,128], index: 8, kind: output, shape index: {2}, may-alias: {3,8}]
  %9 = xla_tuple %s6, %s7, %s8
  %s10 = sld [smem:[#allocation0]]
  $region46: #{batch_renorm_forward.1} parent=0
    _
  %s12 = ssub.s32 1, %s10
  %s13 = scalar_select 0, %s12, %s10
  %14 = sst [smem:[#allocation3]] %s0
  $region1: #{batch_renorm_forward.1} parent=0
    #allocation4 [shape = 'u8[4096]{0}', space=vmem, size = 0x1000, scoped, tag = 'output window, operand 0, single buffered']
    #allocation5 [shape = 's32[1]{0}', space=sflag, size = 0x4, scoped, tag = 'scoped memory for batch_renorm_forward.1']
    %15 = vsyncpa [#allocation5], 0
    // Predicated region
    $region2: #{batch_renorm_forward.1} parent=1 // pred_check
      _
    $region3: #{batch_renorm_forward.1} parent=1 // pred_check_branch
      %17 = sbr.rel (0) target = $region5
    $region4: #{batch_renorm_forward.1} parent=1 // pred_region
      _
    $region5: #{batch_renorm_forward.1} parent=1 // pred_fallthru
      _
    // Predicated region
    $region6: #{batch_renorm_forward.1} parent=1 // pred_check
      _
    $region7: #{batch_renorm_forward.1} parent=1 // pred_check_branch
      %19 = sbr.rel (0) target = $region9
    $region8: #{batch_renorm_forward.1} parent=1 // pred_region
      _
    $region9: #{batch_renorm_forward.1} parent=1 // pred_fallthru
      _
    // Predicated region
    $region10: #{batch_renorm_forward.1} parent=1 // pred_check
      _
    $region11: #{batch_renorm_forward.1} parent=1 // pred_check_branch
      %21 = sbr.rel (0) target = $region13
    $region12: #{batch_renorm_forward.1} parent=1 // pred_region
      _
    $region13: #{batch_renorm_forward.1} parent=1 // pred_fallthru
      _
    // Predicated region
    $region14: #{batch_renorm_forward.1} parent=1 // pred_check
      _
    $region15: #{batch_renorm_forward.1} parent=1 // pred_check_branch
      %23 = sbr.rel (0) target = $region17
    $region16: #{batch_renorm_forward.1} parent=1 // pred_region
      _
    $region17: #{batch_renorm_forward.1} parent=1 // pred_fallthru
      _
    // Predicated region
    $region18: #{batch_renorm_forward.1} parent=1 // pred_check
      _
    $region19: #{batch_renorm_forward.1} parent=1 // pred_check_branch
      %25 = sbr.rel (0) target = $region21
    $region20: #{batch_renorm_forward.1} parent=1 // pred_region
      _
    $region21: #{batch_renorm_forward.1} parent=1 // pred_fallthru
      _
    %s26 = sld [smem:[#allocation3]]
    %p27 = scmp.gt.s32.totalorder %s26, 0
    %v28 = vld [vmem:[%s1] sm:$0xff]
    %v29 = vld [vmem:[%s2] sm:$0x1]
    %v30 = vld [vmem:[%s3] sm:$0x1]
    %v31 = vrot.slane %v28, 4
    %v32 = vadd.f32 %v28, %v31
    %v33 = vrot.slane %v32, 2
    %v34 = vadd.f32 %v32, %v33
    %v35 = vrot.slane %v34, 1
    %v36 = vadd.f32 %v34, %v35
    %v37 = vrcp.pop 8.0
    %v38 = vmul.f32 %v36, %v37
    %v39 = vsub.f32 %v28, %v38
    %v40 = vmul.f32 %v39, %v39
    %v41 = vrot.slane %v40, 4
    %v42 = vadd.f32 %v40, %v41
    %v43 = vrot.slane %v42, 2
    %v44 = vadd.f32 %v42, %v43
    %v45 = vrot.slane %v44, 1
    %v46 = vadd.f32 %v44, %v45
    %v47 = vrcp.pop 7.0
    %v48 = vmul.f32 %v46, %v47
    %v49 = vadd.f32 %v48, 0.001
    %v50 = vrsqrt.pop %v49
    %v51 = vmul.f32 %v49, %v50
    %vm52 = vcmp.eq.f32.partialorder %v49, inf
    %v53 = vsel %vm52, %v49, %v51
    %vm54 = vcmp.eq.f32.partialorder %v49, 0.0
    %v55 = vand.u32 %v49, 2147483648
    %v56 = vsel %vm54, %v55, %v53
    %v57 = vadd.f32 %v30, 0.001
    %v58 = vrsqrt.pop %v57
    %v59 = vmul.f32 %v57, %v58
    %vm60 = vcmp.eq.f32.partialorder %v57, inf
    %v61 = vsel %vm60, %v57, %v59
    %vm62 = vcmp.eq.f32.partialorder %v57, 0.0
    %v63 = vand.u32 %v57, 2147483648
    %v64 = vsel %vm62, %v63, %v61
    %v65 = vrcp.pop %v64
    %v66 = vmul.f32 %v56, %v65
    %v67 = vmax.f32 %v66, 0.33333334
    %v68 = vmin.f32 %v67, 3.0
    %v69 = vsub.f32 %v38, %v29
    %v70 = vmul.f32 %v69, %v65
    %v71 = vmax.f32 %v70, -5.0
    %v72 = vmin.f32 %v71, 5.0
    %v73 = vrsqrt.pop %v48
    %v74 = vmul.f32 %v48, %v73
    %vm75 = vcmp.eq.f32.partialorder %v48, inf
    %v76 = vsel %vm75, %v48, %v74
    %vm77 = vcmp.eq.f32.partialorder %v48, 0.0
    %v78 = vand.u32 %v48, 2147483648
    %v79 = vsel %vm77, %v78, %v76
    %v80 = vmul.f32 %v72, %v79
    %v81 = vrcp.pop %v68
    %v82 = vmul.f32 %v80, %v81
    %v83 = vsub.f32 %v38, %v82
    %v84 = vmul.f32 %v68, %v68
    %v85 = vrcp.pop %v84
    %v86 = vmul.f32 %v48, %v85
    %s87 = scalar_select %p27, 1, 0
    %v88 = vstv %s87
    %vm89 = vcmp.eq.s32.totalorder %v88, 1
    %v90 = vsel %vm89, %v83, %v38
    %v91 = vsel %vm89, %v86, %v48
    %v92 = vadd.f32 %v91, 0.001
    %v93 = vrsqrt.pop %v92
    %v94 = vld [vmem:[%s4] sm:$0x1]
    %v95 = vmul.f32 %v94, %v93
    %v96 = vld [vmem:[%s5] sm:$0x1]
    %v97 = vmul.f32 %v90, %v95
    %v98 = vsub.f32 %v96, %v97
    %v100 = vlaneseq
    %v101 = vshrl.u32 %v100, 7
    %v102 = vsub.s32 0, %v101
    %v103 = vrot.slane %v95, %v102
    %v105 = vmul.f32 %v28, %v103
    %v107 = vlaneseq
    %v108 = vshrl.u32 %v107, 7
    %v109 = vsub.s32 0, %v108
    %v110 = vrot.slane %v98, %v109
    %v112 = vadd.f32 %v105, %v110
    %113 = vst [vmem:[#allocation4] sm:$0xff] %v112
    %v114 = vmul.f32 %v69, 0.01
    %v115 = vadd.f32 %v29, %v114
    %116 = vst [vmem:[%s7] sm:$0x1] %v115
    %v117 = vsub.f32 %v48, %v30
    %v118 = vmul.f32 %v117, 0.01
    %v119 = vadd.f32 %v30, %v118
    %120 = vst [vmem:[%s8] sm:$0x1] %v119
    // Predicated region
    $region22: #{batch_renorm_forward.1} parent=1 // pred_check
      _
    $region23: #{batch_renorm_forward.1} parent=1 // pred_check_branch
      %122 = sbr.rel (0) target = $region25
    $region24: #{batch_renorm_forward.1} parent=1 // pred_region
      %s124 = ssub.s32 128, 128
      %125 = vsyncadd [#allocation5], %s124
      %s127 = sshll.u32 [#allocation4], 4
      %s128 = int_to_ptr.vmem [resolvable:$true] %s127
      %130 = dma.vmem_to_hbm [thread:$0]  %s128, 128, %s6, [#allocation5]
    $region25: #{batch_renorm_forward.1} parent=1 // pred_fallthru
      _
    // Predicated region
    $region26: #{batch_renorm_forward.1} parent=1 // pred_check
      _
    $region27: #{batch_renorm_forward.1} parent=1 // pred_check_branch
      %132 = sbr.rel (0) target = $region29
    $region28: #{batch_renorm_forward.1} parent=1 // pred_region
      _
    $region29: #{batch_renorm_forward.1} parent=1 // pred_fallthru
      _
    // Predicated region
    $region30: #{batch_renorm_forward.1} parent=1 // pred_check
      _
    $region31: #{batch_renorm_forward.1} parent=1 // pred_check_branch
      %134 = sbr.rel (0) target = $region33
    $region32: #{batch_renorm_forward.1} parent=1 // pred_region
      _
    $region33: #{batch_renorm_forward.1} parent=1 // pred_fallthru
      _
    // Predicated region
    $region34: #{batch_renorm_forward.1} parent=1 // pred_check
      _
    $region35: #{batch_renorm_forward.1} parent=1 // pred_check_branch
      %136 = sbr.rel (0) target = $region37
    $region36: #{batch_renorm_forward.1} parent=1 // pred_region
      %137 = dma.done [#allocation5], 128
    $region37: #{batch_renorm_forward.1} parent=1 // pred_fallthru
      _
    // Predicated region
    $region38: #{batch_renorm_forward.1} parent=1 // pred_check
      _
    $region39: #{batch_renorm_forward.1} parent=1 // pred_check_branch
      %139 = sbr.rel (0) target = $region41
    $region40: #{batch_renorm_forward.1} parent=1 // pred_region
      _
    $region41: #{batch_renorm_forward.1} parent=1 // pred_fallthru
      _
    // Predicated region
    $region42: #{batch_renorm_forward.1} parent=1 // pred_check
      _
    $region43: #{batch_renorm_forward.1} parent=1 // pred_check_branch
      %141 = sbr.rel (0) target = $region45
    $region44: #{batch_renorm_forward.1} parent=1 // pred_region
      _
    $region45: #{batch_renorm_forward.1} parent=1 // pred_fallthru
      _
    %142 = vsyncpa [#allocation5], 1

</llo_original>
